<compile_context>
chip_gen: v7x
topology: tpu7x:2x2x1
jax: 0.10.0
libtpu: 0.0.40
codegen_flags: <defaults>
</compile_context>

<pallas_src>
import jax
import jax.numpy as jnp
from jax import lax
from jax.experimental import pallas as pl
from jax.experimental.pallas import tpu as pltpu


def _round_up(x, m):
    return (x + m - 1) // m * m


def _loss_kernel(scale_ref, logits_ref, labels_ref, pair_ref, ym_ref, out_ref):
    # scale_ref : (1, 1)  f32  SMEM scalar == alpha / M
    # logits_ref: (TB, C)      classification logits (native dtype)
    # labels_ref: (TB, 1) i32  integer class labels
    # pair_ref  : (TB, M)      pre-summed regression pair components
    # ym_ref    : (TB, M)      flattened regression targets
    # out_ref   : (TB, 1) f32  per-sample combined loss
    scale = scale_ref[0, 0]

    # --- CrossEntropyLoss(reduction='none'): reduce over the class lane axis ---
    # NOTE: labels are assumed to lie in [0, C); out-of-range labels silently
    # contribute 0 to the target-logit term (CE degenerates to logsumexp).
    logits = logits_ref[...].astype(jnp.float32)                       # (TB, C)
    labels = labels_ref[...]                                           # (TB, 1)
    class_ids = lax.broadcasted_iota(jnp.int32, logits.shape, 1)       # (TB, C)
    onehot = class_ids == labels                                       # (TB, C)
    m = jnp.max(logits, axis=1, keepdims=True)                         # (TB, 1)
    lse = m + jnp.log(jnp.sum(jnp.exp(logits - m), axis=1, keepdims=True))
    tgt = jnp.sum(jnp.where(onehot, logits, 0.0), axis=1, keepdims=True)
    ce = lse - tgt                                                     # (TB, 1)

    # --- regression: p = (tanh(pair) + 1)/2, per-sample SSE over the M lanes ---
    p = (jnp.tanh(pair_ref[...].astype(jnp.float32)) + 1.0) * 0.5      # (TB, M)
    diff = p - ym_ref[...].astype(jnp.float32)
    sse = jnp.sum(diff * diff, axis=1, keepdims=True)                  # (TB, 1)

    # mean (1/M) and alpha are folded into `scale`
    out_ref[...] = ce + scale * sse


def ms_regression_classification_loss(pred_label, y_label, pred_mmap, y_mmap, alpha=1.0):
    B, C = pred_label.shape
    S = pred_mmap.shape[0]
    M = S * (pred_mmap.shape[2] // 2)

    # ---- wrapper glue (single fused XLA reduction over pred_mmap) ----
    # torch: permute(1,0,2) -> reshape(B, S*49, 2) -> sum(-1)
    # TODO(synk): move this stride-2 lane pair-sum into the kernel once Mosaic
    # supports lane-strided slices/gathers (removes the B*M HBM intermediate).
    pair = jnp.transpose(pred_mmap, (1, 0, 2)).reshape(B, M, 2).sum(axis=-1)  # (B, M)
    ym = y_mmap.reshape(B, M)                              # free reshape, native dtype
    labels = y_label.astype(jnp.int32).reshape(B, 1)
    scale = (jnp.asarray(alpha, jnp.float32) / jnp.float32(M)).reshape(1, 1)

    # ---- batch tile: lane-padding-aware VMEM budget for double-buffered blocks ----
    row_bytes = 4 * (2 * _round_up(M, 128)        # pair + ym
                     + _round_up(C, 128)          # logits
                     + 2 * 128)                   # labels + out
    budget = 24 * 1024 * 1024
    cap = max(8, (budget // (2 * row_bytes)) // 8 * 8)
    if B <= 1024:
        tb = _round_up(B, 8)                      # single (possibly ragged) block
    else:
        tb = min(2048, _round_up((B + 1) // 2, 128))   # >=2 steps: pipelining + megacore
    TB = max(8, min(tb, cap))
    grid = (pl.cdiv(B, TB),)
    vmem_limit = int(min(48 * 1024 * 1024, 2 * row_bytes * TB + 12 * 1024 * 1024))

    cost = pl.CostEstimate(
        flops=int(B * (5 * M + 6 * C + 4)),
        transcendentals=int(B * (M + C)),
        bytes_accessed=int(4 * (2 * B * M + B * C + 2 * B)),
    )

    out = pl.pallas_call(
        _loss_kernel,
        out_shape=jax.ShapeDtypeStruct((B, 1), jnp.float32),
        grid=grid,
        in_specs=[
            pl.BlockSpec(memory_space=pltpu.MemorySpace.SMEM),   # scale  (1, 1)
            pl.BlockSpec((TB, C), lambda i: (i, 0)),             # logits (B, C)
            pl.BlockSpec((TB, 1), lambda i: (i, 0)),             # labels (B, 1)
            pl.BlockSpec((TB, M), lambda i: (i, 0)),             # pair   (B, M)
            pl.BlockSpec((TB, M), lambda i: (i, 0)),             # ym     (B, M)
        ],
        out_specs=pl.BlockSpec((TB, 1), lambda i: (i, 0)),
        compiler_params=pltpu.CompilerParams(
            dimension_semantics=("parallel",),
            vmem_limit_bytes=vmem_limit),
        cost_estimate=cost,
    )(scale, pred_label, labels, pair, ym)

    return out[:, 0]


def _reference(pred_label, y_label, pred_mmap, y_mmap, alpha=1.0):
    B = pred_label.shape[0]
    logits = pred_label.astype(jnp.float32)
    ce = jax.nn.logsumexp(logits, axis=-1) - jnp.take_along_axis(
        logits, y_label[:, None].astype(jnp.int32), axis=-1)[:, 0]
    pm = jnp.transpose(pred_mmap, (1, 0, 2)).reshape(B, -1, 2).sum(-1)
    p = (jnp.tanh(pm.astype(jnp.float32)) + 1.0) / 2.0
    ym = y_mmap.reshape(B, -1).astype(jnp.float32)
    return ce + alpha * jnp.mean((p - ym) ** 2, axis=-1)


if __name__ == "__main__":
    # Module has no learnable parameters (alpha is a fixed hyperparameter).
    B, C, S = 2, 4, 8          # batch, num classes, sequence length (49 spatial per step)
    key = jax.random.PRNGKey(0)
    k1, k2, k3, k4 = jax.random.split(key, 4)
    pred_label = jax.random.normal(k1, (B, C), jnp.float32)
    y_label = jax.random.randint(k2, (B,), 0, C)
    pred_mmap = jax.random.normal(k3, (S, B, 2 * 49), jnp.float32)
    y_mmap = jax.random.uniform(k4, (B, S, 7, 7), jnp.float32)

    out = jax.block_until_ready(
        ms_regression_classification_loss(pred_label, y_label, pred_mmap, y_mmap, alpha=1.0)
    )

    ref = _reference(pred_label, y_label, pred_mmap, y_mmap, alpha=1.0)
    assert out.shape == (B,)
    assert jnp.allclose(out, ref, atol=1e-4, rtol=1e-4), (out, ref)
    print("KERNEL_OK")
</pallas_src>

<mosaic_0001>
module attributes {stable_mosaic.version = 11 : i64} {
  func.func @_loss_kernel(%arg0: i32, %arg1: memref<1x1xf32, #tpu.memory_space<smem>>, %arg2: memref<8x4xf32, #tpu.memory_space<vmem>>, %arg3: memref<8x1xi32, #tpu.memory_space<vmem>>, %arg4: memref<8x392xf32, #tpu.memory_space<vmem>>, %arg5: memref<8x392xf32, #tpu.memory_space<vmem>>, %arg6: memref<8x1xf32, #tpu.memory_space<vmem>>) attributes {dimension_semantics = [#tpu.dimension_semantics<parallel>], iteration_bounds = array<i64: 1>, scalar_prefetch = 0 : i64, scratch_operands = 0 : i64, tpu.core_type = #tpu.core_type<tc>, window_params = [{transform_indices = @transform_0, window_bounds = array<i64: 1, 1>}, {transform_indices = @transform_1, window_bounds = array<i64: 8, 4>}, {transform_indices = @transform_2, window_bounds = array<i64: 8, 1>}, {transform_indices = @transform_3, window_bounds = array<i64: 8, 392>}, {transform_indices = @transform_4, window_bounds = array<i64: 8, 392>}, {transform_indices = @transform_5, window_bounds = array<i64: 8, 1>}]} {
    %c0 = arith.constant 0 : index
    %c0_0 = arith.constant 0 : index
    %0 = memref.load %arg1[%c0, %c0_0] : memref<1x1xf32, #tpu.memory_space<smem>>
    %c0_1 = arith.constant 0 : index
    %c0_2 = arith.constant 0 : index
    %1 = vector.load %arg2[%c0_1, %c0_2] : memref<8x4xf32, #tpu.memory_space<vmem>>, vector<8x4xf32>
    %c0_3 = arith.constant 0 : index
    %c0_4 = arith.constant 0 : index
    %2 = vector.load %arg3[%c0_3, %c0_4] : memref<8x1xi32, #tpu.memory_space<vmem>>, vector<8x1xi32>
    %3 = tpu.iota {dimensions = array<i32: 1>} : vector<8x4xi32>
    %4 = vector.broadcast %2 : vector<8x1xi32> to vector<8x4xi32>
    %5 = arith.cmpi eq, %3, %4 : vector<8x4xi32>
    %cst = arith.constant dense<0xFF800000> : vector<8xf32>
    %6 = vector.multi_reduction <maximumf>, %1, %cst [1] : vector<8x4xf32> to vector<8xf32>
    %7 = vector.shape_cast %6 : vector<8xf32> to vector<8x1xf32>
    %8 = vector.broadcast %7 : vector<8x1xf32> to vector<8x4xf32>
    %9 = arith.subf %1, %8 : vector<8x4xf32>
    %10 = math.exp %9 : vector<8x4xf32>
    %cst_5 = arith.constant dense<0.000000e+00> : vector<8xf32>
    %11 = vector.multi_reduction <add>, %10, %cst_5 [1] : vector<8x4xf32> to vector<8xf32>
    %12 = vector.shape_cast %11 : vector<8xf32> to vector<8x1xf32>
    %13 = math.log %12 : vector<8x1xf32>
    %14 = arith.addf %7, %13 : vector<8x1xf32>
    %cst_6 = arith.constant 0.000000e+00 : f32
    %15 = vector.broadcast %cst_6 : f32 to vector<8x4xf32>
    %16 = arith.select %5, %1, %15 : vector<8x4xi1>, vector<8x4xf32>
    %cst_7 = arith.constant dense<0.000000e+00> : vector<8xf32>
    %17 = vector.multi_reduction <add>, %16, %cst_7 [1] : vector<8x4xf32> to vector<8xf32>
    %18 = vector.shape_cast %17 : vector<8xf32> to vector<8x1xf32>
    %19 = arith.subf %14, %18 : vector<8x1xf32>
    %c0_8 = arith.constant 0 : index
    %c0_9 = arith.constant 0 : index
    %20 = vector.load %arg4[%c0_8, %c0_9] : memref<8x392xf32, #tpu.memory_space<vmem>>, vector<8x392xf32>
    %21 = math.tanh %20 : vector<8x392xf32>
    %cst_10 = arith.constant 1.000000e+00 : f32
    %22 = vector.broadcast %cst_10 : f32 to vector<8x392xf32>
    %23 = arith.addf %21, %22 : vector<8x392xf32>
    %cst_11 = arith.constant 5.000000e-01 : f32
    %24 = vector.broadcast %cst_11 : f32 to vector<8x392xf32>
    %25 = arith.mulf %23, %24 : vector<8x392xf32>
    %c0_12 = arith.constant 0 : index
    %c0_13 = arith.constant 0 : index
    %26 = vector.load %arg5[%c0_12, %c0_13] : memref<8x392xf32, #tpu.memory_space<vmem>>, vector<8x392xf32>
    %27 = arith.subf %25, %26 : vector<8x392xf32>
    %28 = arith.mulf %27, %27 : vector<8x392xf32>
    %cst_14 = arith.constant dense<0.000000e+00> : vector<8xf32>
    %29 = vector.multi_reduction <add>, %28, %cst_14 [1] : vector<8x392xf32> to vector<8xf32>
    %30 = vector.shape_cast %29 : vector<8xf32> to vector<8x1xf32>
    %31 = vector.broadcast %0 : f32 to vector<8x1xf32>
    %32 = arith.mulf %31, %30 : vector<8x1xf32>
    %33 = arith.addf %19, %32 : vector<8x1xf32>
    %c0_15 = arith.constant 0 : index
    %c0_16 = arith.constant 0 : index
    %34 = vector.load %arg6[%c0_15, %c0_16] : memref<8x1xf32, #tpu.memory_space<vmem>>, vector<8x1xf32>
    tpu.vector_store %arg6[%c0_15, %c0_16], %33 {strides = array<i32>} : memref<8x1xf32, #tpu.memory_space<vmem>>, vector<8x1xf32>,
    return
  }
  func.func @transform_0(%arg0: i32) -> (i32, i32) {
    %c0_i32 = arith.constant 0 : i32
    %c0_i32_0 = arith.constant 0 : i32
    %c0_i32_1 = arith.constant 0 : i32
    return %c0_i32, %c0_i32_0 : i32, i32
  }
  func.func @transform_1(%arg0: i32) -> (i32, i32) {
    %c0_i32 = arith.constant 0 : i32
    %c0_i32_0 = arith.constant 0 : i32
    return %arg0, %c0_i32 : i32, i32
  }
  func.func @transform_2(%arg0: i32) -> (i32, i32) {
    %c0_i32 = arith.constant 0 : i32
    %c0_i32_0 = arith.constant 0 : i32
    return %arg0, %c0_i32 : i32, i32
  }
  func.func @transform_3(%arg0: i32) -> (i32, i32) {
    %c0_i32 = arith.constant 0 : i32
    %c0_i32_0 = arith.constant 0 : i32
    return %arg0, %c0_i32 : i32, i32
  }
  func.func @transform_4(%arg0: i32) -> (i32, i32) {
    %c0_i32 = arith.constant 0 : i32
    %c0_i32_0 = arith.constant 0 : i32
    return %arg0, %c0_i32 : i32, i32
  }
  func.func @transform_5(%arg0: i32) -> (i32, i32) {
    %c0_i32 = arith.constant 0 : i32
    %c0_i32_0 = arith.constant 0 : i32
    return %arg0, %c0_i32 : i32, i32
  }
}

</mosaic_0001>

<llo_original>
// kernel: tpu_custom_call.1
$region0: #{tpu_custom_call.1}
  #allocation0 [shape = 'u32[]', space=smem, size = 0x4, offset = 0x4, fixed_abs, tag = 'smem constant byte address 0x4 - core index']
  #allocation1 [shape = 'u32[144,128]{1,0:T(1,128)}', space=vmem, size = 0x12000, scoped, tag = 'internal scratch']
  #allocation2 [shape = 'f32[1,1]{1,0:T(1,128)S(6)}', space=smem, size = 0x200, scoped, tag = 'scoped memory for tpu_custom_call.1']
  %s0 = inlined_call_operand.<no memory space> [shape: f32[1,1], index: 0, kind: input, shape index: {}]
  %s1 = inlined_call_operand.vmem [shape: f32[2,4], index: 1, kind: input, shape index: {}]
  %s2 = inlined_call_operand.vmem [shape: s32[2,1], index: 2, kind: input, shape index: {}]
  %s3 = inlined_call_operand.vmem [shape: f32[2,392], index: 3, kind: input, shape index: {}]
  %s4 = inlined_call_operand.vmem [shape: f32[2,392], index: 4, kind: input, shape index: {}]
  %s5 = inlined_call_operand.vmem [shape: f32[2,1], index: 5, kind: output, shape index: {}]
  %s6 = sld [smem:[#allocation0]]
  $region60: #{tpu_custom_call.1} parent=0
    _
  %s8 = ssub.s32 1, %s6
  %s9 = scalar_select 0, %s8, %s6
  %10 = sst [smem:[#allocation2]] %s0
  $region1: #{tpu_custom_call.1} parent=0
    #allocation3 [shape = 'u8[4096]{0}', space=vmem, size = 0x1000, scoped, tag = 'output window, operand 0, single buffered']
    // Predicated region
    $region2: #{tpu_custom_call.1} parent=1 // pred_check
      _
    $region3: #{tpu_custom_call.1} parent=1 // pred_check_branch
      %12 = sbr.rel (0) target = $region5
    $region4: #{tpu_custom_call.1} parent=1 // pred_region
      _
    $region5: #{tpu_custom_call.1} parent=1 // pred_fallthru
      _
    // Predicated region
    $region6: #{tpu_custom_call.1} parent=1 // pred_check
      _
    $region7: #{tpu_custom_call.1} parent=1 // pred_check_branch
      %14 = sbr.rel (0) target = $region9
    $region8: #{tpu_custom_call.1} parent=1 // pred_region
      _
    $region9: #{tpu_custom_call.1} parent=1 // pred_fallthru
      _
    // Predicated region
    $region10: #{tpu_custom_call.1} parent=1 // pred_check
      _
    $region11: #{tpu_custom_call.1} parent=1 // pred_check_branch
      %16 = sbr.rel (0) target = $region13
    $region12: #{tpu_custom_call.1} parent=1 // pred_region
      _
    $region13: #{tpu_custom_call.1} parent=1 // pred_fallthru
      _
    // Predicated region
    $region14: #{tpu_custom_call.1} parent=1 // pred_check
      _
    $region15: #{tpu_custom_call.1} parent=1 // pred_check_branch
      %18 = sbr.rel (0) target = $region17
    $region16: #{tpu_custom_call.1} parent=1 // pred_region
      _
    $region17: #{tpu_custom_call.1} parent=1 // pred_fallthru
      _
    // Predicated region
    $region18: #{tpu_custom_call.1} parent=1 // pred_check
      _
    $region19: #{tpu_custom_call.1} parent=1 // pred_check_branch
      %20 = sbr.rel (0) target = $region21
    $region20: #{tpu_custom_call.1} parent=1 // pred_region
      _
    $region21: #{tpu_custom_call.1} parent=1 // pred_fallthru
      _
    %s21 = sld [smem:[#allocation2]]
    %v22 = vld [vmem:[%s1] sm:$0xff]
    %v23 = vld [vmem:[%s2] sm:$0xff]
    %v24 = vlaneseq
    %v25 = vand.u32 %v24, 127
    %26 = vset.pattern.permute.xlu0 0
    %27 = vperm.xlu0 %26, %v23
    %v28 = vpop.permute.xlu0 %27
    %vm29 = vcmp.eq.s32.totalorder %v25, %v28
    %vm30 = vcmask 31744
    %v31 = vsel %vm30, %v22, -inf
    %32 = vmax.xlane.f32.xlu0 %v31
    %v33 = vpop.xlane.xlu0 %32
    %v34 = vsub.f32 %v22, %v33
    %v35 = vmul.f32 %v34, 1.442695
    %v36 = vpow.pop %v35
    %v37 = vsel %vm30, %v36, 0.0
    %38 = vadd.xlane.f32.xlu0 %v37
    %v39 = vpop.xlane.xlu0 %38
    %v40 = vlog2.pop %v39
    %v41 = vmul.f32 %v40, 0.6931472
    %v42 = vadd.f32 %v33, %v41
    %v43 = vsel %vm29, %v22, 0.0
    %v44 = vsel %vm30, %v43, 0.0
    %45 = vadd.xlane.f32.xlu0 %v44
    %v46 = vpop.xlane.xlu0 %45
    %v47 = vsub.f32 %v42, %v46
    %v48 = vld [vmem:[%s3] sm:$0xff]
    %v49 = vld [vmem:[%s3 + $0x8] sm:$0xff]
    %v50 = vld [vmem:[%s3 + $0x10] sm:$0xff]
    %v51 = vld [vmem:[%s3 + $0x18] sm:$0xff]
    %v52 = vtanh.pop %v48
    %v53 = vtanh.pop %v49
    %v54 = vtanh.pop %v50
    %v55 = vtanh.pop %v51
    %v56 = vadd.f32 %v52, 1.0
    %v57 = vadd.f32 %v53, 1.0
    %v58 = vadd.f32 %v54, 1.0
    %v59 = vadd.f32 %v55, 1.0
    %v60 = vmul.f32 %v56, 0.5
    %v61 = vmul.f32 %v57, 0.5
    %v62 = vmul.f32 %v58, 0.5
    %v63 = vmul.f32 %v59, 0.5
    %v64 = vld [vmem:[%s4] sm:$0xff]
    %v65 = vld [vmem:[%s4 + $0x8] sm:$0xff]
    %v66 = vld [vmem:[%s4 + $0x10] sm:$0xff]
    %v67 = vld [vmem:[%s4 + $0x18] sm:$0xff]
    %v68 = vsub.f32 %v60, %v64
    %v69 = vsub.f32 %v61, %v65
    %v70 = vsub.f32 %v62, %v66
    %v71 = vsub.f32 %v63, %v67
    %v72 = vmul.f32 %v68, %v68
    %v73 = vmul.f32 %v69, %v69
    %v74 = vmul.f32 %v70, %v70
    %v75 = vmul.f32 %v71, %v71
    %v80 = vcombine.low %v72, %v73
    %v81 = vcombine.high %v72, %v73
    %v82 = vcombine.low %v74, %v75
    %v83 = vcombine.high %v74, %v75
    %v85 = vunpack.c.l.s4 1983009808
    %v86 = vunpack.c.0.s8 %v85
    %v87 = vlaneseq
    %v88 = vshrl.u32 %v87, 7
    %v89 = vsub.s32 %v86, %v88
    %v90 = vrot.slane %v80, %v89
    %v92 = vunpack.c.l.s4 1983009808
    %v93 = vunpack.c.0.s8 %v92
    %v94 = vlaneseq
    %v95 = vshrl.u32 %v94, 7
    %v96 = vsub.s32 %v93, %v95
    %v97 = vrot.slane %v81, %v96
    %v99 = vunpack.c.l.s4 1983009808
    %v100 = vunpack.c.0.s8 %v99
    %v101 = vlaneseq
    %v102 = vshrl.u32 %v101, 7
    %v103 = vsub.s32 %v100, %v102
    %v104 = vrot.slane %v82, %v103
    %v106 = vunpack.c.l.s4 1983009808
    %v107 = vunpack.c.0.s8 %v106
    %v108 = vlaneseq
    %v109 = vshrl.u32 %v108, 7
    %v110 = vsub.s32 %v107, %v109
    %v111 = vrot.slane %v83, %v110
    %v112 = vcombine.low %v90, %v104
    %v113 = vcombine.high %v90, %v104
    %v114 = vcombine.low %v97, %v111
    %v115 = vcombine.high %v97, %v111
    %v120 = vadd.f32 %v112, %v113
    %v121 = vadd.f32 %v120, %v114
    %vm122 = vcmask 64512
    %v123 = vsel %vm122, %v115, 0.0
    %v124 = vadd.f32 %v121, %v123
    %125 = vadd.xlane.f32.xlu0 %v124
    %v126 = vpop.xlane.xlu0 %125
    %v127 = vstv %s21
    %v128 = vmul.f32 %v127, %v126
    %v129 = vadd.f32 %v47, %v128
    %vm130 = vcmask 7168
    %131 = vst.msk [vmem:[#allocation3] sm:$0xff] %vm130, %v129
    // Predicated region
    $region22: #{tpu_custom_call.1} parent=1 // pred_check
      _
    $region23: #{tpu_custom_call.1} parent=1 // pred_check_branch
      %133 = sbr.rel (0) target = $region25
    $region24: #{tpu_custom_call.1} parent=1 // pred_region
      // Predicated region
      $region26: #{tpu_custom_call.1} parent=24 // pred_check
        _
      $region27: #{tpu_custom_call.1} parent=24 // pred_check_branch
        %135 = sbr.rel (0) target = $region29
      $region28: #{tpu_custom_call.1} parent=24 // pred_region
        // Predicated region
        $region30: #{tpu_custom_call.1} parent=28 // pred_check
          _
        $region31: #{tpu_custom_call.1} parent=28 // pred_check_branch
          %137 = sbr.rel target = $region33
        $region32: #{tpu_custom_call.1} parent=28 // pred_region
          // Predicated region
          $region45: #{tpu_custom_call.1} parent=32 // pred_check
            _
          $region46: #{tpu_custom_call.1} parent=32 // pred_check_branch
            %152 = sbr.rel (0) target = $region48
          $region47: #{tpu_custom_call.1} parent=32 // pred_region
            loop: start=0, step=1, limit=1
            $region49: #{tpu_custom_call.1} parent=47 // loop_pre_header
              _
            $region50: #{tpu_custom_call.1} parent=47 // loop_header
              %s155 = sphi 0, %s159
              %p156 = scmp.ge.s32.totalorder %s155, 1
              %s160 = sphi [#allocation3], [#allocation3]
              %s161 = sphi %s5, %s5
            $region51: #{tpu_custom_call.1} parent=47 // loop_header_branch
              %158 = sbr.rel (%p156) target = $region55
            $region52: #{tpu_custom_call.1} parent=47 // loop_body
              %v162 = vld [vmem:[%s160] sm:$0x3]
              %163 = vst [vmem:[%s161] sm:$0x3] %v162
            $region53: #{tpu_custom_call.1} parent=47 // loop_footer
              %s159 = sadd.s32 1, %s155
            $region54: #{tpu_custom_call.1} parent=47 // loop_footer_branch
              %154 = sbr.rel target = $region50
            $region55: #{tpu_custom_call.1} parent=47 // loop_exit
              _
          $region48: #{tpu_custom_call.1} parent=32 // pred_fallthru
            _
        $region33: #{tpu_custom_call.1} parent=28 // pred_fallthru
          _
        // Predicated region
        $region34: #{tpu_custom_call.1} parent=28 // pred_check
          _
        $region35: #{tpu_custom_call.1} parent=28 // pred_check_branch
          %139 = sbr.rel (0) target = $region37
        $region36: #{tpu_custom_call.1} parent=28 // pred_region
          loop: start=0, step=1, limit=1
          $region38: #{tpu_custom_call.1} parent=36 // loop_pre_header
            _
          $region39: #{tpu_custom_call.1} parent=36 // loop_header
            %s142 = sphi 0, %s146
            %p143 = scmp.ge.s32.totalorder %s142, 1
            %s147 = sphi [#allocation3], [#allocation3]
            %s148 = sphi %s5, %s5
          $region40: #{tpu_custom_call.1} parent=36 // loop_header_branch
            %145 = sbr.rel (%p143) target = $region44
          $region41: #{tpu_custom_call.1} parent=36 // loop_body
            %v149 = vld [vmem:[%s147] sm:$0x3]
            %150 = vst [vmem:[%s148] sm:$0x3] %v149
          $region42: #{tpu_custom_call.1} parent=36 // loop_footer
            %s146 = sadd.s32 1, %s142
          $region43: #{tpu_custom_call.1} parent=36 // loop_footer_branch
            %141 = sbr.rel target = $region39
          $region44: #{tpu_custom_call.1} parent=36 // loop_exit
            _
        $region37: #{tpu_custom_call.1} parent=28 // pred_fallthru
          _
      $region29: #{tpu_custom_call.1} parent=24 // pred_fallthru
        _
      %164 = vnop
    $region25: #{tpu_custom_call.1} parent=1 // pred_fallthru
      _
    // Predicated region
    $region56: #{tpu_custom_call.1} parent=1 // pred_check
      _
    $region57: #{tpu_custom_call.1} parent=1 // pred_check_branch
      %166 = sbr.rel (0) target = $region59
    $region58: #{tpu_custom_call.1} parent=1 // pred_region
      _
    $region59: #{tpu_custom_call.1} parent=1 // pred_fallthru
      _

</llo_original>
